<compile_context>
chip_gen: v6e
topology: v6e:2x2x1
jax: 0.10.0
libtpu: 0.0.40
codegen_flags: <defaults>
</compile_context>

<pallas_src>
import math
from functools import partial

import jax
import jax.numpy as jnp
from jax import lax
from jax.experimental import pallas as pl
from jax.experimental.pallas import tpu as pltpu


# ------------------------------- Pallas kernel ------------------------------

def _pc_sampler_kernel(eps_ref, s2eps_ref, g_ref, gsq_ref,            # SMEM (P,)
                       sigwsig_ref, epsb2_ref, gsqb2_ref,             # VMEM tables
                       hb_pred_ref, hb_corr_ref, w1x_ref, w2_ref,     # VMEM resident
                       x0_ref, noise_ref,                             # VMEM
                       x_out_ref,                                     # VMEM out
                       *, num_pred, num_corr):
    """Full predictor-corrector sampling loop in a single kernel launch.

    * x stays in vregs (fori_loop carry); x_out_ref is written exactly once.
    * Weights + hoisted conditioning biases stay resident for the whole loop.
    * Per-step scalars come from SMEM; per-step rows (sigma*Wsig, eps*b2,
      g^2*b2) from tiny VMEM tables indexed by the (dynamic) step index.
    * All noise is pre-generated outside the kernel (independent of x).
    """
    hb_pred = hb_pred_ref[...]                      # (N, H) f32  (real conds)
    hb_corr = hb_corr_ref[...]                      # (N, H) f32  (zero conds)
    w1x = w1x_ref[...]                              # (D, H) bf16 (MXU operand)
    w2 = w2_ref[...]                                # (H, D) bf16 (MXU operand)

    def mlp(x, hbias):
        # tanh(x @ W1x + hbias) @ W2 -- bf16 MXU operands, f32 accumulation.
        # (b2 is folded into the per-step eps*b2 / g^2*b2 tables.)
        h = jnp.dot(x.astype(jnp.bfloat16), w1x,
                    preferred_element_type=jnp.float32)
        h = jnp.tanh(h + hbias)
        return jnp.dot(h.astype(jnp.bfloat16), w2,
                       preferred_element_type=jnp.float32)

    def step(i, x, add_pred_noise):
        eps = eps_ref[i]
        s2eps = s2eps_ref[i]
        gsq = gsq_ref[i]
        sw = sigwsig_ref[i]                          # (1, H)  sigma_i * Wsig
        epsb2 = epsb2_ref[i]                         # (1, D)  eps_i * b2
        gsqb2 = gsqb2_ref[i]                         # (1, D)  g_i^2 * b2
        # sigma_i*Wsig broadcast hoisted: once per predictor step, not once
        # per score call (sigma is constant across the corrector chain).
        hbc = hb_corr + sw
        hbp = hb_pred + sw

        # --- annealed-Langevin corrector: x += eps*score + sqrt(2*eps)*z ----
        def corr_body(c, xc):
            z = noise_ref[i * (num_corr + 1) + c]
            return xc + eps * mlp(xc, hbc) + epsb2 + s2eps * z

        x = lax.fori_loop(0, num_corr, corr_body, x, unroll=True)

        # --- Euler-Maruyama predictor; VE-SDE drift f == 0, so
        #     x - (f - g^2*score) [+ g*z]  ==  x + g^2*score [+ g*z] ---------
        x = x + gsq * mlp(x, hbp) + gsqb2
        if add_pred_noise:                           # compile-time gate: the
            z = noise_ref[i * (num_corr + 1) + num_corr]
            x = x + g_ref[i] * z                     # last step skips this
        return x

    # Rolled over the first num_pred-1 steps (no full unroll -> bounded Mosaic
    # program size at realistic step counts); last step peeled statically so
    # add_noise=False costs nothing.
    x = lax.fori_loop(0, num_pred - 1, lambda i, xv: step(i, xv, True),
                      x0_ref[...])
    x_out_ref[...] = step(num_pred - 1, x, False)


# ----------------------------- synthetic pieces ------------------------------

class VESDE:
    """Variance-exploding SDE: sigma(t) = smin*(smax/smin)^t, zero drift."""

    def __init__(self, sigma_min=0.01, sigma_max=10.0):
        self.sigma_min = sigma_min
        self.sigma_max = sigma_max

    def perturb_kernel_std(self, t):
        return self.sigma_min * (self.sigma_max / self.sigma_min) ** t

    def diffusion_coeff(self, t):
        return self.perturb_kernel_std(t) * math.sqrt(
            2.0 * (math.log(self.sigma_max) - math.log(self.sigma_min)))


def make_score_params(key, d, h, cg, cl):
    k1, k2, k3, k4, k5, k6, k7 = jax.random.split(key, 7)
    f32 = jnp.float32
    return {
        "w1":   jax.random.normal(k1, (2 * d, h), f32) / math.sqrt(2 * d),
        "wsig": jax.random.normal(k2, (1, h), f32) * 0.1,
        "wg":   jax.random.normal(k3, (cg, h), f32) / math.sqrt(cg),
        "wl":   jax.random.normal(k4, (cl, h), f32) / math.sqrt(cl),
        "b1":   jax.random.normal(k5, (1, h), f32) * 0.1,
        "w2":   jax.random.normal(k6, (h, d), f32) / math.sqrt(h),
        "b2":   jax.random.normal(k7, (1, d), f32) * 0.1,
    }


def _draw_noise(sde, key, n, d, num_pred, num_corr):
    """Prior sample + all per-step Gaussian noise (independent of x)."""
    k_prior, k_noise = jax.random.split(key)
    x0 = sde.sigma_max * jax.random.normal(k_prior, (n, d), jnp.float32)
    noise = jax.random.normal(
        k_noise, (num_pred * (num_corr + 1), n, d), jnp.float32)
    return x0, noise


# --------------------------- sampler (forward) -------------------------------

def build_sampler(sde, *, predictor_steps, corrector_steps, target_snr,
                  t_min=0.03):
    """Returns a jitted sampler(params, y, gcond, lcond, key) -> x."""
    dt = 1.0 / predictor_steps
    P, C = predictor_steps, corrector_steps

    @jax.jit
    def sampler(params, y, global_condition, local_condition, key):
        b, s, d = y.shape
        n = b * s
        h = params["wsig"].shape[-1]

        # -- per-step scalars (t = ones(b)*ts[i] => identical across batch) --
        ts = jnp.linspace(1.0, t_min, P)
        sigma = sde.perturb_kernel_std(ts).astype(jnp.float32)          # (P,)
        eps = (2.0 * jnp.square(target_snr * sigma)).astype(jnp.float32)
        s2eps = jnp.sqrt(2.0 * eps)
        g = (sde.diffusion_coeff(ts) * math.sqrt(dt)).astype(jnp.float32)
        gsq = jnp.square(g)

        # -- per-step row tables: scalar x bias products folded once ---------
        sigwsig = (sigma[:, None] * params["wsig"]).reshape(P, 1, h)
        eps_b2 = (eps[:, None] * params["b2"]).reshape(P, 1, d)
        gsq_b2 = (gsq[:, None] * params["b2"]).reshape(P, 1, d)

        # -- hoist loop-invariant conditioning matmuls (computed once) -------
        y_rows = y.reshape(n, d)
        gc_rows = jnp.broadcast_to(
            global_condition[:, None, :],
            (b, s, global_condition.shape[-1])).reshape(n, -1)
        lc_rows = local_condition.reshape(n, -1)
        w1y = params["w1"][d:]
        # TODO(synk): reference corrector calls score_model(x, y, t) with an
        # unspecified signature; the synthetic model uses zero global/local
        # conditions on the corrector path (so those matmuls vanish).
        hb_corr = (y_rows @ w1y + params["b1"]).astype(jnp.float32)
        hb_pred = (hb_corr + gc_rows @ params["wg"]
                   + lc_rows @ params["wl"]).astype(jnp.float32)

        w1x = params["w1"][:d].astype(jnp.bfloat16)                     # (D,H)
        w2 = params["w2"].astype(jnp.bfloat16)                          # (H,D)

        # prior sample + all per-step noise, generated off the serial
        # x -> score -> x chain (and without the on-chip PRNG)
        x0, noise = _draw_noise(sde, key, n, d, P, C)

        kernel = partial(_pc_sampler_kernel, num_pred=P, num_corr=C)
        smem = pl.BlockSpec(memory_space=pltpu.MemorySpace.SMEM)
        vmem = pl.BlockSpec(memory_space=pltpu.MemorySpace.VMEM)

        # TODO(synk): for large B*S add a row-tiled grid over N with
        # dimension_semantics=("parallel",) (v7x: 64 MiB VMEM, 2 TensorCores);
        # unnecessary at these sizes.
        x = pl.pallas_call(
            kernel,
            out_shape=jax.ShapeDtypeStruct((n, d), jnp.float32),
            in_specs=[smem, smem, smem, smem,
                      vmem, vmem, vmem, vmem, vmem, vmem, vmem, vmem, vmem],
            out_specs=vmem,
        )(eps, s2eps, g, gsq, sigwsig, eps_b2, gsq_b2,
          hb_pred, hb_corr, w1x, w2, x0, noise)

        return x.reshape(b, s, d)

    return sampler


# --------------------------- pure-JAX reference ------------------------------

def reference_sampler(sde, params, y, global_condition, local_condition, key,
                      *, predictor_steps, corrector_steps, target_snr, t_min):
    """Same synthetic score model / same noise, evaluated with plain JAX."""
    b, s, d = y.shape
    n = b * s
    dt = 1.0 / predictor_steps
    P, C = predictor_steps, corrector_steps

    ts = jnp.linspace(1.0, t_min, P)
    sigma = sde.perturb_kernel_std(ts)
    eps = 2.0 * jnp.square(target_snr * sigma)
    s2eps = jnp.sqrt(2.0 * eps)
    g = sde.diffusion_coeff(ts) * math.sqrt(dt)
    gsq = jnp.square(g)

    y_rows = y.reshape(n, d)
    gc_rows = jnp.broadcast_to(
        global_condition[:, None, :],
        (b, s, global_condition.shape[-1])).reshape(n, -1)
    lc_rows = local_condition.reshape(n, -1)
    w1x = params["w1"][:d].astype(jnp.bfloat16)
    w1y = params["w1"][d:]
    w2 = params["w2"].astype(jnp.bfloat16)
    hb_corr = y_rows @ w1y + params["b1"]
    hb_pred = hb_corr + gc_rows @ params["wg"] + lc_rows @ params["wl"]

    def score(x, sig, hb):
        hid = jnp.dot(x.astype(jnp.bfloat16), w1x,
                      preferred_element_type=jnp.float32)
        hid = jnp.tanh(hid + hb + sig * params["wsig"])
        return jnp.dot(hid.astype(jnp.bfloat16), w2,
                       preferred_element_type=jnp.float32) + params["b2"]

    x, noise = _draw_noise(sde, key, n, d, P, C)
    for i in range(P):
        for c in range(C):
            x = x + eps[i] * score(x, sigma[i], hb_corr) \
                  + s2eps[i] * noise[i * (C + 1) + c]
        x = x + gsq[i] * score(x, sigma[i], hb_pred)
        if i != P - 1:
            x = x + g[i] * noise[i * (C + 1) + C]
    return x.reshape(b, s, d)


# ---------------------------------- main -------------------------------------

if __name__ == "__main__":
    B, S, D = 2, 8, 32          # batch, sequence, feature dim
    H, CG, CL = 128, 16, 32     # hidden padded to 128 (full lane width)
    PRED_STEPS, CORR_STEPS = 4, 2
    TARGET_SNR, T_MIN = 0.1, 0.03

    root = jax.random.PRNGKey(0)
    k_y, k_gc, k_lc, k_params, k_sample = jax.random.split(root, 5)

    y = jax.random.normal(k_y, (B, S, D), jnp.float32)
    global_condition = jax.random.normal(k_gc, (B, CG), jnp.float32)
    local_condition = jax.random.normal(k_lc, (B, S, CL), jnp.float32)

    sde = VESDE(sigma_min=0.01, sigma_max=10.0)
    params = make_score_params(k_params, D, H, CG, CL)

    sampler = build_sampler(sde, predictor_steps=PRED_STEPS,
                            corrector_steps=CORR_STEPS,
                            target_snr=TARGET_SNR, t_min=T_MIN)

    x_out = sampler(params, y, global_condition, local_condition, k_sample)
    jax.block_until_ready(x_out)

    assert x_out.shape == (B, S, D) and x_out.dtype == jnp.float32
    assert bool(jnp.all(jnp.isfinite(x_out)))

    x_ref = reference_sampler(sde, params, y, global_condition,
                              local_condition, k_sample,
                              predictor_steps=PRED_STEPS,
                              corrector_steps=CORR_STEPS,
                              target_snr=TARGET_SNR, t_min=T_MIN)
    rel_err = float(jnp.max(jnp.abs(x_out - x_ref))
                    / (jnp.max(jnp.abs(x_ref)) + 1e-6))
    assert rel_err < 5e-2, f"kernel/reference mismatch: rel err {rel_err}"

    print("KERNEL_OK")
</pallas_src>

<mosaic_0001>
module attributes {stable_mosaic.version = 11 : i64} {
  func.func @_pc_sampler_kernel(%arg0: memref<4xf32, #tpu.memory_space<smem>>, %arg1: memref<4xf32, #tpu.memory_space<smem>>, %arg2: memref<4xf32, #tpu.memory_space<smem>>, %arg3: memref<4xf32, #tpu.memory_space<smem>>, %arg4: memref<4x1x128xf32, #tpu.memory_space<vmem>>, %arg5: memref<4x1x32xf32, #tpu.memory_space<vmem>>, %arg6: memref<4x1x32xf32, #tpu.memory_space<vmem>>, %arg7: memref<16x128xf32, #tpu.memory_space<vmem>>, %arg8: memref<16x128xf32, #tpu.memory_space<vmem>>, %arg9: memref<32x128xbf16, #tpu.memory_space<vmem>>, %arg10: memref<128x32xbf16, #tpu.memory_space<vmem>>, %arg11: memref<16x32xf32, #tpu.memory_space<vmem>>, %arg12: memref<12x16x32xf32, #tpu.memory_space<vmem>>, %arg13: memref<16x32xf32, #tpu.memory_space<vmem>>) attributes {dimension_semantics = [], scalar_prefetch = 0 : i64, scratch_operands = 0 : i64, tpu.core_type = #tpu.core_type<tc>} {
    %c0 = arith.constant 0 : index
    %c0_0 = arith.constant 0 : index
    %0 = vector.load %arg7[%c0, %c0_0] : memref<16x128xf32, #tpu.memory_space<vmem>>, vector<16x128xf32>
    %c0_1 = arith.constant 0 : index
    %c0_2 = arith.constant 0 : index
    %1 = vector.load %arg8[%c0_1, %c0_2] : memref<16x128xf32, #tpu.memory_space<vmem>>, vector<16x128xf32>
    %c0_3 = arith.constant 0 : index
    %c0_4 = arith.constant 0 : index
    %2 = vector.load %arg9[%c0_3, %c0_4] : memref<32x128xbf16, #tpu.memory_space<vmem>>, vector<32x128xbf16>
    %c0_5 = arith.constant 0 : index
    %c0_6 = arith.constant 0 : index
    %3 = vector.load %arg10[%c0_5, %c0_6] : memref<128x32xbf16, #tpu.memory_space<vmem>>, vector<128x32xbf16>
    %c0_7 = arith.constant 0 : index
    %c0_8 = arith.constant 0 : index
    %4 = vector.load %arg11[%c0_7, %c0_8] : memref<16x32xf32, #tpu.memory_space<vmem>>, vector<16x32xf32>
    %c0_i32 = arith.constant 0 : i32
    %c3_i32 = arith.constant 3 : i32
    %5 = arith.addi %c0_i32, %c3_i32 : i32
    %c1_i32 = arith.constant 1 : i32
    %6 = scf.for %arg14 = %c0_i32 to %5 step %c1_i32 iter_args(%arg15 = %4) -> (vector<16x32xf32>)  : i32 {
      %68 = arith.index_cast %arg14 : i32 to index
      %69 = memref.load %arg0[%68] : memref<4xf32, #tpu.memory_space<smem>>
      %70 = arith.index_cast %arg14 : i32 to index
      %71 = memref.load %arg1[%70] : memref<4xf32, #tpu.memory_space<smem>>
      %72 = arith.index_cast %arg14 : i32 to index
      %73 = memref.load %arg3[%72] : memref<4xf32, #tpu.memory_space<smem>>
      %74 = arith.index_cast %arg14 : i32 to index
      %c0_35 = arith.constant 0 : index
      %c0_36 = arith.constant 0 : index
      %75 = vector.load %arg4[%74, %c0_35, %c0_36] : memref<4x1x128xf32, #tpu.memory_space<vmem>>, vector<1x1x128xf32>
      %76 = vector.shape_cast %75 : vector<1x1x128xf32> to vector<1x128xf32>
      %77 = arith.index_cast %arg14 : i32 to index
      %c0_37 = arith.constant 0 : index
      %c0_38 = arith.constant 0 : index
      %78 = vector.load %arg5[%77, %c0_37, %c0_38] : memref<4x1x32xf32, #tpu.memory_space<vmem>>, vector<1x1x32xf32>
      %79 = vector.shape_cast %78 : vector<1x1x32xf32> to vector<1x32xf32>
      %80 = arith.index_cast %arg14 : i32 to index
      %c0_39 = arith.constant 0 : index
      %c0_40 = arith.constant 0 : index
      %81 = vector.load %arg6[%80, %c0_39, %c0_40] : memref<4x1x32xf32, #tpu.memory_space<vmem>>, vector<1x1x32xf32>
      %82 = vector.shape_cast %81 : vector<1x1x32xf32> to vector<1x32xf32>
      %83 = vector.broadcast %76 : vector<1x128xf32> to vector<16x128xf32>
      %84 = arith.addf %1, %83 : vector<16x128xf32>
      %85 = vector.broadcast %76 : vector<1x128xf32> to vector<16x128xf32>
      %86 = arith.addf %0, %85 : vector<16x128xf32>
      %c0_i32_41 = arith.constant 0 : i32
      %c3_i32_42 = arith.constant 3 : i32
      %87 = arith.muli %arg14, %c3_i32_42 : i32
      %88 = arith.addi %87, %c0_i32_41 : i32
      %89 = arith.index_cast %88 : i32 to index
      %c0_43 = arith.constant 0 : index
      %c0_44 = arith.constant 0 : index
      %90 = vector.load %arg12[%89, %c0_43, %c0_44] : memref<12x16x32xf32, #tpu.memory_space<vmem>>, vector<1x16x32xf32>
      %91 = vector.shape_cast %90 : vector<1x16x32xf32> to vector<16x32xf32>
      %92 = arith.truncf %arg15 : vector<16x32xf32> to vector<16x32xbf16>
      %cst_45 = arith.constant dense<0.000000e+00> : vector<16x128xf32>
      %93 = tpu.matmul %92, %2, %cst_45 {dimension_numbers = #tpu.dot_dimension_numbers<[1], [0], [0], [1], [0, 0, 1, 1], [], []>} : vector<16x32xbf16>, vector<32x128xbf16>, vector<16x128xf32> -> vector<16x128xf32>
      %94 = arith.addf %93, %84 : vector<16x128xf32>
      %95 = math.tanh %94 : vector<16x128xf32>
      %96 = arith.truncf %95 : vector<16x128xf32> to vector<16x128xbf16>
      %cst_46 = arith.constant dense<0.000000e+00> : vector<16x32xf32>
      %97 = tpu.matmul %96, %3, %cst_46 {dimension_numbers = #tpu.dot_dimension_numbers<[1], [0], [0], [1], [0, 0, 1, 1], [], []>} : vector<16x128xbf16>, vector<128x32xbf16>, vector<16x32xf32> -> vector<16x32xf32>
      %98 = vector.broadcast %69 : f32 to vector<16x32xf32>
      %99 = arith.mulf %98, %97 : vector<16x32xf32>
      %100 = arith.addf %arg15, %99 : vector<16x32xf32>
      %101 = vector.broadcast %79 : vector<1x32xf32> to vector<16x32xf32>
      %102 = arith.addf %100, %101 : vector<16x32xf32>
      %103 = vector.broadcast %71 : f32 to vector<16x32xf32>
      %104 = arith.mulf %103, %91 : vector<16x32xf32>
      %105 = arith.addf %102, %104 : vector<16x32xf32>
      %c1_i32_47 = arith.constant 1 : i32
      %c3_i32_48 = arith.constant 3 : i32
      %106 = arith.muli %arg14, %c3_i32_48 : i32
      %107 = arith.addi %106, %c1_i32_47 : i32
      %108 = arith.index_cast %107 : i32 to index
      %c0_49 = arith.constant 0 : index
      %c0_50 = arith.constant 0 : index
      %109 = vector.load %arg12[%108, %c0_49, %c0_50] : memref<12x16x32xf32, #tpu.memory_space<vmem>>, vector<1x16x32xf32>
      %110 = vector.shape_cast %109 : vector<1x16x32xf32> to vector<16x32xf32>
      %111 = arith.truncf %105 : vector<16x32xf32> to vector<16x32xbf16>
      %cst_51 = arith.constant dense<0.000000e+00> : vector<16x128xf32>
      %112 = tpu.matmul %111, %2, %cst_51 {dimension_numbers = #tpu.dot_dimension_numbers<[1], [0], [0], [1], [0, 0, 1, 1], [], []>} : vector<16x32xbf16>, vector<32x128xbf16>, vector<16x128xf32> -> vector<16x128xf32>
      %113 = arith.addf %112, %84 : vector<16x128xf32>
      %114 = math.tanh %113 : vector<16x128xf32>
      %115 = arith.truncf %114 : vector<16x128xf32> to vector<16x128xbf16>
      %cst_52 = arith.constant dense<0.000000e+00> : vector<16x32xf32>
      %116 = tpu.matmul %115, %3, %cst_52 {dimension_numbers = #tpu.dot_dimension_numbers<[1], [0], [0], [1], [0, 0, 1, 1], [], []>} : vector<16x128xbf16>, vector<128x32xbf16>, vector<16x32xf32> -> vector<16x32xf32>
      %117 = vector.broadcast %69 : f32 to vector<16x32xf32>
      %118 = arith.mulf %117, %116 : vector<16x32xf32>
      %119 = arith.addf %105, %118 : vector<16x32xf32>
      %120 = vector.broadcast %79 : vector<1x32xf32> to vector<16x32xf32>
      %121 = arith.addf %119, %120 : vector<16x32xf32>
      %122 = vector.broadcast %71 : f32 to vector<16x32xf32>
      %123 = arith.mulf %122, %110 : vector<16x32xf32>
      %124 = arith.addf %121, %123 : vector<16x32xf32>
      %c2_i32_53 = arith.constant 2 : i32
      %125 = arith.truncf %124 : vector<16x32xf32> to vector<16x32xbf16>
      %cst_54 = arith.constant dense<0.000000e+00> : vector<16x128xf32>
      %126 = tpu.matmul %125, %2, %cst_54 {dimension_numbers = #tpu.dot_dimension_numbers<[1], [0], [0], [1], [0, 0, 1, 1], [], []>} : vector<16x32xbf16>, vector<32x128xbf16>, vector<16x128xf32> -> vector<16x128xf32>
      %127 = arith.addf %126, %86 : vector<16x128xf32>
      %128 = math.tanh %127 : vector<16x128xf32>
      %129 = arith.truncf %128 : vector<16x128xf32> to vector<16x128xbf16>
      %cst_55 = arith.constant dense<0.000000e+00> : vector<16x32xf32>
      %130 = tpu.matmul %129, %3, %cst_55 {dimension_numbers = #tpu.dot_dimension_numbers<[1], [0], [0], [1], [0, 0, 1, 1], [], []>} : vector<16x128xbf16>, vector<128x32xbf16>, vector<16x32xf32> -> vector<16x32xf32>
      %131 = vector.broadcast %73 : f32 to vector<16x32xf32>
      %132 = arith.mulf %131, %130 : vector<16x32xf32>
      %133 = arith.addf %124, %132 : vector<16x32xf32>
      %134 = vector.broadcast %82 : vector<1x32xf32> to vector<16x32xf32>
      %135 = arith.addf %133, %134 : vector<16x32xf32>
      %c3_i32_56 = arith.constant 3 : i32
      %136 = arith.muli %arg14, %c3_i32_56 : i32
      %c2_i32_57 = arith.constant 2 : i32
      %137 = arith.addi %136, %c2_i32_57 : i32
      %138 = arith.index_cast %137 : i32 to index
      %c0_58 = arith.constant 0 : index
      %c0_59 = arith.constant 0 : index
      %139 = vector.load %arg12[%138, %c0_58, %c0_59] : memref<12x16x32xf32, #tpu.memory_space<vmem>>, vector<1x16x32xf32>
      %140 = vector.shape_cast %139 : vector<1x16x32xf32> to vector<16x32xf32>
      %141 = arith.index_cast %arg14 : i32 to index
      %142 = memref.load %arg2[%141] : memref<4xf32, #tpu.memory_space<smem>>
      %143 = vector.broadcast %142 : f32 to vector<16x32xf32>
      %144 = arith.mulf %143, %140 : vector<16x32xf32>
      %145 = arith.addf %135, %144 : vector<16x32xf32>
      scf.yield %145 : vector<16x32xf32>
    }
    %c3_i32_9 = arith.constant 3 : i32
    %c3 = arith.constant 3 : index
    %7 = memref.load %arg0[%c3] : memref<4xf32, #tpu.memory_space<smem>>
    %c3_10 = arith.constant 3 : index
    %8 = memref.load %arg1[%c3_10] : memref<4xf32, #tpu.memory_space<smem>>
    %c3_11 = arith.constant 3 : index
    %9 = memref.load %arg3[%c3_11] : memref<4xf32, #tpu.memory_space<smem>>
    %c3_12 = arith.constant 3 : index
    %c0_13 = arith.constant 0 : index
    %c0_14 = arith.constant 0 : index
    %10 = vector.load %arg4[%c3_12, %c0_13, %c0_14] : memref<4x1x128xf32, #tpu.memory_space<vmem>>, vector<1x1x128xf32>
    %11 = vector.shape_cast %10 : vector<1x1x128xf32> to vector<1x128xf32>
    %c3_15 = arith.constant 3 : index
    %c0_16 = arith.constant 0 : index
    %c0_17 = arith.constant 0 : index
    %12 = vector.load %arg5[%c3_15, %c0_16, %c0_17] : memref<4x1x32xf32, #tpu.memory_space<vmem>>, vector<1x1x32xf32>
    %13 = vector.shape_cast %12 : vector<1x1x32xf32> to vector<1x32xf32>
    %c3_18 = arith.constant 3 : index
    %c0_19 = arith.constant 0 : index
    %c0_20 = arith.constant 0 : index
    %14 = vector.load %arg6[%c3_18, %c0_19, %c0_20] : memref<4x1x32xf32, #tpu.memory_space<vmem>>, vector<1x1x32xf32>
    %15 = vector.shape_cast %14 : vector<1x1x32xf32> to vector<1x32xf32>
    %16 = vector.broadcast %11 : vector<1x128xf32> to vector<16x128xf32>
    %17 = arith.addf %1, %16 : vector<16x128xf32>
    %18 = vector.broadcast %11 : vector<1x128xf32> to vector<16x128xf32>
    %19 = arith.addf %0, %18 : vector<16x128xf32>
    %c0_i32_21 = arith.constant 0 : i32
    %c9_i32 = arith.constant 9 : i32
    %20 = arith.addi %c9_i32, %c0_i32_21 : i32
    %21 = arith.index_cast %20 : i32 to index
    %c0_22 = arith.constant 0 : index
    %c0_23 = arith.constant 0 : index
    %22 = vector.load %arg12[%21, %c0_22, %c0_23] : memref<12x16x32xf32, #tpu.memory_space<vmem>>, vector<1x16x32xf32>
    %23 = vector.shape_cast %22 : vector<1x16x32xf32> to vector<16x32xf32>
    %24 = arith.truncf %6 : vector<16x32xf32> to vector<16x32xbf16>
    %cst = arith.constant dense<0.000000e+00> : vector<16x128xf32>
    %25 = tpu.matmul %24, %2, %cst {dimension_numbers = #tpu.dot_dimension_numbers<[1], [0], [0], [1], [0, 0, 1, 1], [], []>} : vector<16x32xbf16>, vector<32x128xbf16>, vector<16x128xf32> -> vector<16x128xf32>
    %26 = arith.addf %25, %17 : vector<16x128xf32>
    %27 = math.tanh %26 : vector<16x128xf32>
    %28 = arith.truncf %27 : vector<16x128xf32> to vector<16x128xbf16>
    %cst_24 = arith.constant dense<0.000000e+00> : vector<16x32xf32>
    %29 = tpu.matmul %28, %3, %cst_24 {dimension_numbers = #tpu.dot_dimension_numbers<[1], [0], [0], [1], [0, 0, 1, 1], [], []>} : vector<16x128xbf16>, vector<128x32xbf16>, vector<16x32xf32> -> vector<16x32xf32>
    %30 = vector.broadcast %7 : f32 to vector<16x32xf32>
    %31 = arith.mulf %30, %29 : vector<16x32xf32>
    %32 = arith.addf %6, %31 : vector<16x32xf32>
    %33 = vector.broadcast %13 : vector<1x32xf32> to vector<16x32xf32>
    %34 = arith.addf %32, %33 : vector<16x32xf32>
    %35 = vector.broadcast %8 : f32 to vector<16x32xf32>
    %36 = arith.mulf %35, %23 : vector<16x32xf32>
    %37 = arith.addf %34, %36 : vector<16x32xf32>
    %c1_i32_25 = arith.constant 1 : i32
    %c9_i32_26 = arith.constant 9 : i32
    %38 = arith.addi %c9_i32_26, %c1_i32_25 : i32
    %39 = arith.index_cast %38 : i32 to index
    %c0_27 = arith.constant 0 : index
    %c0_28 = arith.constant 0 : index
    %40 = vector.load %arg12[%39, %c0_27, %c0_28] : memref<12x16x32xf32, #tpu.memory_space<vmem>>, vector<1x16x32xf32>
    %41 = vector.shape_cast %40 : vector<1x16x32xf32> to vector<16x32xf32>
    %42 = arith.truncf %37 : vector<16x32xf32> to vector<16x32xbf16>
    %cst_29 = arith.constant dense<0.000000e+00> : vector<16x128xf32>
    %43 = tpu.matmul %42, %2, %cst_29 {dimension_numbers = #tpu.dot_dimension_numbers<[1], [0], [0], [1], [0, 0, 1, 1], [], []>} : vector<16x32xbf16>, vector<32x128xbf16>, vector<16x128xf32> -> vector<16x128xf32>
    %44 = arith.addf %43, %17 : vector<16x128xf32>
    %45 = math.tanh %44 : vector<16x128xf32>
    %46 = arith.truncf %45 : vector<16x128xf32> to vector<16x128xbf16>
    %cst_30 = arith.constant dense<0.000000e+00> : vector<16x32xf32>
    %47 = tpu.matmul %46, %3, %cst_30 {dimension_numbers = #tpu.dot_dimension_numbers<[1], [0], [0], [1], [0, 0, 1, 1], [], []>} : vector<16x128xbf16>, vector<128x32xbf16>, vector<16x32xf32> -> vector<16x32xf32>
    %48 = vector.broadcast %7 : f32 to vector<16x32xf32>
    %49 = arith.mulf %48, %47 : vector<16x32xf32>
    %50 = arith.addf %37, %49 : vector<16x32xf32>
    %51 = vector.broadcast %13 : vector<1x32xf32> to vector<16x32xf32>
    %52 = arith.addf %50, %51 : vector<16x32xf32>
    %53 = vector.broadcast %8 : f32 to vector<16x32xf32>
    %54 = arith.mulf %53, %41 : vector<16x32xf32>
    %55 = arith.addf %52, %54 : vector<16x32xf32>
    %c2_i32 = arith.constant 2 : i32
    %56 = arith.truncf %55 : vector<16x32xf32> to vector<16x32xbf16>
    %cst_31 = arith.constant dense<0.000000e+00> : vector<16x128xf32>
    %57 = tpu.matmul %56, %2, %cst_31 {dimension_numbers = #tpu.dot_dimension_numbers<[1], [0], [0], [1], [0, 0, 1, 1], [], []>} : vector<16x32xbf16>, vector<32x128xbf16>, vector<16x128xf32> -> vector<16x128xf32>
    %58 = arith.addf %57, %19 : vector<16x128xf32>
    %59 = math.tanh %58 : vector<16x128xf32>
    %60 = arith.truncf %59 : vector<16x128xf32> to vector<16x128xbf16>
    %cst_32 = arith.constant dense<0.000000e+00> : vector<16x32xf32>
    %61 = tpu.matmul %60, %3, %cst_32 {dimension_numbers = #tpu.dot_dimension_numbers<[1], [0], [0], [1], [0, 0, 1, 1], [], []>} : vector<16x128xbf16>, vector<128x32xbf16>, vector<16x32xf32> -> vector<16x32xf32>
    %62 = vector.broadcast %9 : f32 to vector<16x32xf32>
    %63 = arith.mulf %62, %61 : vector<16x32xf32>
    %64 = arith.addf %55, %63 : vector<16x32xf32>
    %65 = vector.broadcast %15 : vector<1x32xf32> to vector<16x32xf32>
    %66 = arith.addf %64, %65 : vector<16x32xf32>
    %c0_33 = arith.constant 0 : index
    %c0_34 = arith.constant 0 : index
    %67 = vector.load %arg13[%c0_33, %c0_34] : memref<16x32xf32, #tpu.memory_space<vmem>>, vector<16x32xf32>
    tpu.vector_store %arg13[%c0_33, %c0_34], %66 {strides = array<i32>} : memref<16x32xf32, #tpu.memory_space<vmem>>, vector<16x32xf32>,
    return
  }
}

</mosaic_0001>

<llo_original>
// kernel: sampler.1
$region0: #{sampler.1}
  #allocation0 [shape = 'u32[]', space=smem, size = 0x4, offset = 0x4, fixed_abs, tag = 'smem constant byte address 0x4 - core index']
  #allocation1 [shape = 'u32[144,128]{1,0:T(1,128)}', space=vmem, size = 0x12000, scoped, tag = 'internal scratch']
  %s0 = inlined_call_operand.vmem [shape: f32[4], index: 0, kind: input, shape index: {}]
  %s1 = inlined_call_operand.vmem [shape: f32[4], index: 1, kind: input, shape index: {}]
  %s2 = inlined_call_operand.vmem [shape: f32[4], index: 2, kind: input, shape index: {}]
  %s3 = inlined_call_operand.vmem [shape: f32[4], index: 3, kind: input, shape index: {}]
  %s4 = inlined_call_operand.vmem [shape: f32[4,1,128], index: 4, kind: input, shape index: {}]
  %s5 = inlined_call_operand.vmem [shape: f32[4,1,32], index: 5, kind: input, shape index: {}]
  %s6 = inlined_call_operand.vmem [shape: f32[4,1,32], index: 6, kind: input, shape index: {}]
  %s7 = inlined_call_operand.vmem [shape: f32[16,128], index: 7, kind: input, shape index: {}]
  %s8 = inlined_call_operand.vmem [shape: f32[16,128], index: 8, kind: input, shape index: {}]
  %s9 = inlined_call_operand.vmem [shape: bf16[32,128], index: 9, kind: input, shape index: {}]
  %s10 = inlined_call_operand.vmem [shape: bf16[128,32], index: 10, kind: input, shape index: {}]
  %s11 = inlined_call_operand.vmem [shape: f32[16,32], index: 11, kind: input, shape index: {}]
  %s12 = inlined_call_operand.vmem [shape: f32[12,16,32], index: 12, kind: input, shape index: {}]
  %s13 = inlined_call_operand.hbm [shape: f32[16,32], index: 13, kind: output, shape index: {}]
  %s14 = sld [smem:[#allocation0]]
  $region85: #{sampler.1} parent=0
    _
  %s16 = ssub.s32 1, %s14
  %s17 = scalar_select 0, %s16, %s14
  $region1: #{sampler.1} parent=0
    #allocation2 [shape = 'u8[512]{0}', space=smem, size = 0x200, scoped, tag = 'input window, operand 0, single buffered']
    #allocation3 [shape = 's32[1]{0}', space=sflag, size = 0x4, scoped, tag = 'scoped memory for sampler.1']
    #allocation4 [shape = 's32[1]{0}', space=sflag, size = 0x4, scoped, tag = 'scoped memory for sampler.1']
    #allocation5 [shape = 'u8[512]{0}', space=smem, size = 0x200, scoped, tag = 'input window, operand 1, single buffered']
    #allocation6 [shape = 's32[1]{0}', space=sflag, size = 0x4, scoped, tag = 'scoped memory for sampler.1']
    #allocation7 [shape = 'u8[512]{0}', space=smem, size = 0x200, scoped, tag = 'input window, operand 2, single buffered']
    #allocation8 [shape = 'u8[512]{0}', space=smem, size = 0x200, scoped, tag = 'input window, operand 3, single buffered']
    #allocation9 [shape = 's32[1]{0}', space=sflag, size = 0x4, scoped, tag = 'scoped memory for sampler.1']
    #allocation10 [shape = 'u8[8192]{0}', space=vmem, size = 0x2000, scoped, tag = 'output window, operand 0, single buffered']
    %18 = vsyncpa [#allocation4], 0
    %19 = vsyncpa [#allocation6], 0
    %20 = vsyncpa [#allocation9], 0
    %21 = vsyncpa [#allocation3], 0
    // Predicated region
    $region2: #{sampler.1} parent=1 // pred_check
      _
    $region3: #{sampler.1} parent=1 // pred_check_branch
      %23 = sbr.rel (0) target = $region5
    $region4: #{sampler.1} parent=1 // pred_region
      %s25 = ssub.s32 16, 16
      %26 = vsyncadd [#allocation4], %s25
      %s28 = sshll.u32 %s0, 4
      %s29 = int_to_ptr.vmem [resolvable:$true] %s28
      %31 = dma.vmem_to_smem %s29, 16, [#allocation2], [#allocation4]
    $region5: #{sampler.1} parent=1 // pred_fallthru
      _
    // Predicated region
    $region6: #{sampler.1} parent=1 // pred_check
      _
    $region7: #{sampler.1} parent=1 // pred_check_branch
      %33 = sbr.rel (0) target = $region9
    $region8: #{sampler.1} parent=1 // pred_region
      %s35 = ssub.s32 16, 16
      %36 = vsyncadd [#allocation6], %s35
      %s38 = sshll.u32 %s1, 4
      %s39 = int_to_ptr.vmem [resolvable:$true] %s38
      %41 = dma.vmem_to_smem %s39, 16, [#allocation5], [#allocation6]
    $region9: #{sampler.1} parent=1 // pred_fallthru
      _
    // Predicated region
    $region10: #{sampler.1} parent=1 // pred_check
      _
    $region11: #{sampler.1} parent=1 // pred_check_branch
      %43 = sbr.rel (0) target = $region13
    $region12: #{sampler.1} parent=1 // pred_region
      %s45 = ssub.s32 16, 16
      %46 = vsyncadd [#allocation6], %s45
      %s48 = sshll.u32 %s2, 4
      %s49 = int_to_ptr.vmem [resolvable:$true] %s48
      %51 = dma.vmem_to_smem %s49, 16, [#allocation7], [#allocation6]
    $region13: #{sampler.1} parent=1 // pred_fallthru
      _
    // Predicated region
    $region14: #{sampler.1} parent=1 // pred_check
      _
    $region15: #{sampler.1} parent=1 // pred_check_branch
      %53 = sbr.rel (0) target = $region17
    $region16: #{sampler.1} parent=1 // pred_region
      %s55 = ssub.s32 16, 16
      %56 = vsyncadd [#allocation9], %s55
      %s58 = sshll.u32 %s3, 4
      %s59 = int_to_ptr.vmem [resolvable:$true] %s58
      %61 = dma.vmem_to_smem %s59, 16, [#allocation8], [#allocation9]
    $region17: #{sampler.1} parent=1 // pred_fallthru
      _
    // Predicated region
    $region18: #{sampler.1} parent=1 // pred_check
      _
    $region19: #{sampler.1} parent=1 // pred_check_branch
      %63 = sbr.rel (0) target = $region21
    $region20: #{sampler.1} parent=1 // pred_region
      _
    $region21: #{sampler.1} parent=1 // pred_fallthru
      _
    // Predicated region
    $region22: #{sampler.1} parent=1 // pred_check
      _
    $region23: #{sampler.1} parent=1 // pred_check_branch
      %65 = sbr.rel (0) target = $region25
    $region24: #{sampler.1} parent=1 // pred_region
      _
    $region25: #{sampler.1} parent=1 // pred_fallthru
      _
    // Predicated region
    $region26: #{sampler.1} parent=1 // pred_check
      _
    $region27: #{sampler.1} parent=1 // pred_check_branch
      %67 = sbr.rel (0) target = $region29
    $region28: #{sampler.1} parent=1 // pred_region
      _
    $region29: #{sampler.1} parent=1 // pred_fallthru
      _
    // Predicated region
    $region30: #{sampler.1} parent=1 // pred_check
      _
    $region31: #{sampler.1} parent=1 // pred_check_branch
      %69 = sbr.rel (0) target = $region33
    $region32: #{sampler.1} parent=1 // pred_region
      _
    $region33: #{sampler.1} parent=1 // pred_fallthru
      _
    // Predicated region
    $region34: #{sampler.1} parent=1 // pred_check
      _
    $region35: #{sampler.1} parent=1 // pred_check_branch
      %71 = sbr.rel (0) target = $region37
    $region36: #{sampler.1} parent=1 // pred_region
      _
    $region37: #{sampler.1} parent=1 // pred_fallthru
      _
    // Predicated region
    $region38: #{sampler.1} parent=1 // pred_check
      _
    $region39: #{sampler.1} parent=1 // pred_check_branch
      %73 = sbr.rel (0) target = $region41
    $region40: #{sampler.1} parent=1 // pred_region
      _
    $region41: #{sampler.1} parent=1 // pred_fallthru
      _
    // Predicated region
    $region42: #{sampler.1} parent=1 // pred_check
      _
    $region43: #{sampler.1} parent=1 // pred_check_branch
      %75 = sbr.rel (0) target = $region45
    $region44: #{sampler.1} parent=1 // pred_region
      _
    $region45: #{sampler.1} parent=1 // pred_fallthru
      _
    // Predicated region
    $region46: #{sampler.1} parent=1 // pred_check
      _
    $region47: #{sampler.1} parent=1 // pred_check_branch
      %77 = sbr.rel (0) target = $region49
    $region48: #{sampler.1} parent=1 // pred_region
      _
    $region49: #{sampler.1} parent=1 // pred_fallthru
      _
    // Predicated region
    $region50: #{sampler.1} parent=1 // pred_check
      _
    $region51: #{sampler.1} parent=1 // pred_check_branch
      %79 = sbr.rel (0) target = $region53
    $region52: #{sampler.1} parent=1 // pred_region
      _
    $region53: #{sampler.1} parent=1 // pred_fallthru
      _
    // Predicated region
    $region54: #{sampler.1} parent=1 // pred_check
      _
    $region55: #{sampler.1} parent=1 // pred_check_branch
      %81 = sbr.rel (0) target = $region57
    $region56: #{sampler.1} parent=1 // pred_region
      %82 = dma.done [#allocation4], 16
    $region57: #{sampler.1} parent=1 // pred_fallthru
      _
    // Predicated region
    $region58: #{sampler.1} parent=1 // pred_check
      _
    $region59: #{sampler.1} parent=1 // pred_check_branch
      %84 = sbr.rel (0) target = $region61
    $region60: #{sampler.1} parent=1 // pred_region
      %85 = dma.done [#allocation6], 16
    $region61: #{sampler.1} parent=1 // pred_fallthru
      _
    // Predicated region
    $region62: #{sampler.1} parent=1 // pred_check
      _
    $region63: #{sampler.1} parent=1 // pred_check_branch
      %87 = sbr.rel (0) target = $region65
    $region64: #{sampler.1} parent=1 // pred_region
      %88 = dma.done [#allocation6], 16
    $region65: #{sampler.1} parent=1 // pred_fallthru
      _
    // Predicated region
    $region66: #{sampler.1} parent=1 // pred_check
      _
    $region67: #{sampler.1} parent=1 // pred_check_branch
      %90 = sbr.rel (0) target = $region69
    $region68: #{sampler.1} parent=1 // pred_region
      %91 = dma.done [#allocation9], 16
    $region69: #{sampler.1} parent=1 // pred_fallthru
      _
    %92 = sfence
    %v94 = vld [vmem:[%s7] sm:$0xff]
    %v95 = vld [vmem:[%s7 + $0x8] sm:$0xff]
    %v96 = vld [vmem:[%s8] sm:$0xff]
    %v97 = vld [vmem:[%s8 + $0x8] sm:$0xff]
    %v98 = vld [vmem:[%s9] sm:$0xf]
    %v99 = vld [vmem:[%s9 + $0x4] sm:$0xf]
    %v100 = vld [vmem:[%s9 + $0x8] sm:$0xf]
    %v101 = vld [vmem:[%s9 + $0xc] sm:$0xf]
    %v102 = vld [vmem:[%s10] sm:$0xf]
    %v103 = vld [vmem:[%s10 + $0x4] sm:$0xf]
    %v104 = vld [vmem:[%s10 + $0x8] sm:$0xf]
    %v105 = vld [vmem:[%s10 + $0xc] sm:$0xf]
    %v106 = vld [vmem:[%s10 + $0x10] sm:$0xf]
    %v107 = vld [vmem:[%s10 + $0x14] sm:$0xf]
    %v108 = vld [vmem:[%s10 + $0x18] sm:$0xf]
    %v109 = vld [vmem:[%s10 + $0x1c] sm:$0xf]
    %v110 = vld [vmem:[%s10 + $0x20] sm:$0xf]
    %v111 = vld [vmem:[%s10 + $0x24] sm:$0xf]
    %v112 = vld [vmem:[%s10 + $0x28] sm:$0xf]
    %v113 = vld [vmem:[%s10 + $0x2c] sm:$0xf]
    %v114 = vld [vmem:[%s10 + $0x30] sm:$0xf]
    %v115 = vld [vmem:[%s10 + $0x34] sm:$0xf]
    %v116 = vld [vmem:[%s10 + $0x38] sm:$0xf]
    %v117 = vld [vmem:[%s10 + $0x3c] sm:$0xf]
    %v118 = vld [vmem:[%s11] sm:$0xff]
    %v119 = vld [vmem:[%s11 + $0x8] sm:$0xff]
    loop: start=0, step=1, limit=3
    $region70: #{sampler.1} parent=1 // loop_pre_header
      _
    $region71: #{sampler.1} parent=1 // loop_header
      %s121 = sphi 0, %s125
      %p122 = scmp.ge.s32.totalorder %s121, 3
      %v126 = vphi %v118, %v535
      %v127 = vphi %v119, %v536
    $region72: #{sampler.1} parent=1 // loop_header_branch
      %124 = sbr.rel (%p122) target = $region76
    $region73: #{sampler.1} parent=1 // loop_body
      %s128 = sld [smem:[#allocation2 + %s121]]
      %s129 = sld [smem:[#allocation5 + %s121]]
      %s130 = sld [smem:[#allocation8 + %s121]]
      %s131 = scalar_lea.vmem %s4, %s121
      %v132 = vld [vmem:[%s131] sm:$0x1]
      %s133 = scalar_lea.vmem %s5, %s121
      %v134 = vld [vmem:[%s133] sm:$0x1]
      %s135 = scalar_lea.vmem %s6, %s121
      %v136 = vld [vmem:[%s135] sm:$0x1]
      %v138 = vlaneseq
      %v139 = vshrl.u32 %v138, 7
      %v140 = vsub.s32 0, %v139
      %v141 = vrot.slane %v132, %v140
      %v143 = vadd.f32 %v96, %v141
      %v144 = vadd.f32 %v97, %v141
      %v145 = vadd.f32 %v94, %v141
      %v146 = vadd.f32 %v95, %v141
      %s147 = smul.u32 %s121, 3
      %s148 = smul.u32 %s147, 16
      %s149 = scalar_lea.vmem %s12, %s148
      %v150 = vld [vmem:[%s149] sm:$0xff]
      %v151 = vld [vmem:[%s149 + $0x8] sm:$0xff]
      %v152 = vpack.c.bf16 %v127, %v126
      %v157 = vunpack.c.l.b16 %v98
      %v158 = vunpack.c.l.b16 %v99
      %v159 = vunpack.c.l.b16 %v100
      %v160 = vunpack.c.l.b16 %v101
      %v161 = vpack.c.b16 %v158, %v157
      %v162 = vpack.c.b16 %v160, %v159
      %vm165 = vcmask 261120
      %v167 = vsel %vm165, %v152, 0
      %169 = vmatprep.subr.bf16.mxu0 0
      %170 = vmatpush1.bf16.msra.mxu0 0
      %171 = vmatprep.subr.bf16.mxu0 0
      %172 = vmatpush1.bf16.msra.mxu0 0
      %173 = vmatprep.subr.bf16.mxu0 0
      %174 = vmatpush1.bf16.msra.mxu0 0
      %175 = vmatprep.subr.bf16.mxu0 0
      %176 = vmatpush1.bf16.msra.mxu0 0
      %177 = vmatprep.subr.bf16.mxu0 0
      %178 = vmatpush1.bf16.msra.mxu0 0
      %179 = vmatprep.subr.bf16.mxu0 0
      %180 = vmatpush1.bf16.msra.mxu0 0
      %181 = vmatprep.subr.bf16.mxu0 0
      %182 = vmatpush1.bf16.msra.mxu0 %v162
      %183 = vmatprep.subr.bf16.mxu0 0
      %184 = vmatpush1.bf16.msra.mxu0 %v161
      %185 = vmatprep.subr.bf16.mxu0 0
      %186 = vmatpush2.bf16.msra.mxu0 0
      %187 = vmatprep.subr.bf16.mxu0 0
      %188 = vmatpush2.bf16.msra.mxu0 0
      %189 = vmatprep.subr.bf16.mxu0 0
      %190 = vmatpush2.bf16.msra.mxu0 0
      %191 = vmatprep.subr.bf16.mxu0 0
      %192 = vmatpush2.bf16.msra.mxu0 0
      %193 = vmatprep.subr.bf16.mxu0 0
      %194 = vmatpush2.bf16.msra.mxu0 0
      %195 = vmatprep.subr.bf16.mxu0 0
      %196 = vmatpush2.bf16.msra.mxu0 0
      %197 = vmatprep.subr.bf16.mxu0 0
      %198 = vmatpush2.bf16.msra.mxu0 0
      %199 = vmatprep.subr.bf16.mxu0 0
      %200 = vmatpush2.bf16.msra.mxu0 0
      %201 = vmatprep.mubr.bf16.mxu0 0
      %202 = vmatmul.mubr.bf16.gmra.mxu0 %v167
      %v203 = vpop.f32.mrf.mxu0
      %v204 = vadd.f32 %v143, %v203
      %v205 = vpop.f32.mrf.mxu0
      %v206 = vpop.f32.mrf.mxu0
      %v207 = vadd.f32 %v144, %v206
      %v208 = vpop.f32.mrf.mxu0
      %209 = vdwg.mxu0
      %v210 = vtanh.pop %v204
      %v211 = vtanh.pop %v207
      %v212 = vpack.c.bf16 %v211, %v210
      %v229 = vunpack.c.l.b16 %v102
      %v230 = vunpack.c.l.b16 %v103
      %v231 = vunpack.c.l.b16 %v104
      %v232 = vunpack.c.l.b16 %v105
      %v233 = vunpack.c.l.b16 %v106
      %v234 = vunpack.c.l.b16 %v107
      %v235 = vunpack.c.l.b16 %v108
      %v236 = vunpack.c.l.b16 %v109
      %v237 = vunpack.c.l.b16 %v110
      %v238 = vunpack.c.l.b16 %v111
      %v239 = vunpack.c.l.b16 %v112
      %v240 = vunpack.c.l.b16 %v113
      %v241 = vunpack.c.l.b16 %v114
      %v242 = vunpack.c.l.b16 %v115
      %v243 = vunpack.c.l.b16 %v116
      %v244 = vunpack.c.l.b16 %v117
      %v245 = vpack.c.b16 %v230, %v229
      %v246 = vpack.c.b16 %v232, %v231
      %v247 = vpack.c.b16 %v234, %v233
      %v248 = vpack.c.b16 %v236, %v235
      %v249 = vpack.c.b16 %v238, %v237
      %v250 = vpack.c.b16 %v240, %v239
      %v251 = vpack.c.b16 %v242, %v241
      %v252 = vpack.c.b16 %v244, %v243
      %261 = vmatprep.subr.bf16.mxu0 0
      %262 = vmatpush1.bf16.msra.mxu0 %v252
      %263 = vmatprep.subr.bf16.mxu0 0
      %264 = vmatpush1.bf16.msra.mxu0 %v251
      %265 = vmatprep.subr.bf16.mxu0 0
      %266 = vmatpush1.bf16.msra.mxu0 %v250
      %267 = vmatprep.subr.bf16.mxu0 0
      %268 = vmatpush1.bf16.msra.mxu0 %v249
      %269 = vmatprep.subr.bf16.mxu0 0
      %270 = vmatpush1.bf16.msra.mxu0 %v248
      %271 = vmatprep.subr.bf16.mxu0 0
      %272 = vmatpush1.bf16.msra.mxu0 %v247
      %273 = vmatprep.subr.bf16.mxu0 0
      %274 = vmatpush1.bf16.msra.mxu0 %v246
      %275 = vmatprep.subr.bf16.mxu0 0
      %276 = vmatpush1.bf16.msra.mxu0 %v245
      %277 = vmatprep.subr.bf16.mxu0 0
      %278 = vmatpush2.bf16.msra.mxu0 0
      %279 = vmatprep.subr.bf16.mxu0 0
      %280 = vmatpush2.bf16.msra.mxu0 0
      %281 = vmatprep.subr.bf16.mxu0 0
      %282 = vmatpush2.bf16.msra.mxu0 0
      %283 = vmatprep.subr.bf16.mxu0 0
      %284 = vmatpush2.bf16.msra.mxu0 0
      %285 = vmatprep.subr.bf16.mxu0 0
      %286 = vmatpush2.bf16.msra.mxu0 0
      %287 = vmatprep.subr.bf16.mxu0 0
      %288 = vmatpush2.bf16.msra.mxu0 0
      %289 = vmatprep.subr.bf16.mxu0 0
      %290 = vmatpush2.bf16.msra.mxu0 0
      %291 = vmatprep.subr.bf16.mxu0 0
      %292 = vmatpush2.bf16.msra.mxu0 0
      %293 = vmatprep.mubr.bf16.mxu0 0
      %294 = vmatmul.mubr.bf16.gmra.mxu0 %v212
      %v295 = vpop.f32.mrf.mxu0
      %v296 = vadd.f32 0.0, %v295
      %v297 = vpop.f32.mrf.mxu0
      %v298 = vpop.f32.mrf.mxu0
      %v299 = vadd.f32 0.0, %v298
      %v300 = vpop.f32.mrf.mxu0
      %301 = vdwg.mxu0
      %v302 = vstv %s128
      %v303 = vmul.f32 %v302, %v296
      %v304 = vmul.f32 %v302, %v299
      %v305 = vadd.f32 %v126, %v303
      %v306 = vadd.f32 %v127, %v304
      %v308 = vlaneseq
      %v309 = vshrl.u32 %v308, 7
      %v310 = vsub.s32 0, %v309
      %v311 = vrot.slane %v134, %v310
      %v313 = vadd.f32 %v305, %v311
      %v314 = vadd.f32 %v306, %v311
      %v315 = vstv %s129
      %v316 = vmul.f32 %v315, %v150
      %v317 = vmul.f32 %v315, %v151
      %v318 = vadd.f32 %v313, %v316
      %v319 = vadd.f32 %v314, %v317
      %s320 = sadd.s32 %s147, 1
      %s321 = smul.u32 %s320, 16
      %s322 = scalar_lea.vmem %s12, %s321
      %v323 = vld [vmem:[%s322] sm:$0xff]
      %v324 = vld [vmem:[%s322 + $0x8] sm:$0xff]
      %v325 = vpack.c.bf16 %v319, %v318
      %v327 = vsel %vm165, %v325, 0
      %329 = vmatprep.subr.bf16.mxu0 0
      %330 = vmatpush1.bf16.msra.mxu0 0
      %331 = vmatprep.subr.bf16.mxu0 0
      %332 = vmatpush1.bf16.msra.mxu0 0
      %333 = vmatprep.subr.bf16.mxu0 0
      %334 = vmatpush1.bf16.msra.mxu0 0
      %335 = vmatprep.subr.bf16.mxu0 0
      %336 = vmatpush1.bf16.msra.mxu0 0
      %337 = vmatprep.subr.bf16.mxu0 0
      %338 = vmatpush1.bf16.msra.mxu0 0
      %339 = vmatprep.subr.bf16.mxu0 0
      %340 = vmatpush1.bf16.msra.mxu0 0
      %341 = vmatprep.subr.bf16.mxu0 0
      %342 = vmatpush1.bf16.msra.mxu0 %v162
      %343 = vmatprep.subr.bf16.mxu0 0
      %344 = vmatpush1.bf16.msra.mxu0 %v161
      %345 = vmatprep.subr.bf16.mxu0 0
      %346 = vmatpush2.bf16.msra.mxu0 0
      %347 = vmatprep.subr.bf16.mxu0 0
      %348 = vmatpush2.bf16.msra.mxu0 0
      %349 = vmatprep.subr.bf16.mxu0 0
      %350 = vmatpush2.bf16.msra.mxu0 0
      %351 = vmatprep.subr.bf16.mxu0 0
      %352 = vmatpush2.bf16.msra.mxu0 0
      %353 = vmatprep.subr.bf16.mxu0 0
      %354 = vmatpush2.bf16.msra.mxu0 0
      %355 = vmatprep.subr.bf16.mxu0 0
      %356 = vmatpush2.bf16.msra.mxu0 0
      %357 = vmatprep.subr.bf16.mxu0 0
      %358 = vmatpush2.bf16.msra.mxu0 0
      %359 = vmatprep.subr.bf16.mxu0 0
      %360 = vmatpush2.bf16.msra.mxu0 0
      %361 = vmatprep.mubr.bf16.mxu0 0
      %362 = vmatmul.mubr.bf16.gmra.mxu0 %v327
      %v363 = vpop.f32.mrf.mxu0
      %v364 = vadd.f32 %v143, %v363
      %v365 = vpop.f32.mrf.mxu0
      %v366 = vpop.f32.mrf.mxu0
      %v367 = vadd.f32 %v144, %v366
      %v368 = vpop.f32.mrf.mxu0
      %369 = vdwg.mxu0
      %v370 = vtanh.pop %v364
      %v371 = vtanh.pop %v367
      %v372 = vpack.c.bf16 %v371, %v370
      %373 = vmatprep.subr.bf16.mxu0 0
      %374 = vmatpush1.bf16.msra.mxu0 %v252
      %375 = vmatprep.subr.bf16.mxu0 0
      %376 = vmatpush1.bf16.msra.mxu0 %v251
      %377 = vmatprep.subr.bf16.mxu0 0
      %378 = vmatpush1.bf16.msra.mxu0 %v250
      %379 = vmatprep.subr.bf16.mxu0 0
      %380 = vmatpush1.bf16.msra.mxu0 %v249
      %381 = vmatprep.subr.bf16.mxu0 0
      %382 = vmatpush1.bf16.msra.mxu0 %v248
      %383 = vmatprep.subr.bf16.mxu0 0
      %384 = vmatpush1.bf16.msra.mxu0 %v247
      %385 = vmatprep.subr.bf16.mxu0 0
      %386 = vmatpush1.bf16.msra.mxu0 %v246
      %387 = vmatprep.subr.bf16.mxu0 0
      %388 = vmatpush1.bf16.msra.mxu0 %v245
      %389 = vmatprep.subr.bf16.mxu0 0
      %390 = vmatpush2.bf16.msra.mxu0 0
      %391 = vmatprep.subr.bf16.mxu0 0
      %392 = vmatpush2.bf16.msra.mxu0 0
      %393 = vmatprep.subr.bf16.mxu0 0
      %394 = vmatpush2.bf16.msra.mxu0 0
      %395 = vmatprep.subr.bf16.mxu0 0
      %396 = vmatpush2.bf16.msra.mxu0 0
      %397 = vmatprep.subr.bf16.mxu0 0
      %398 = vmatpush2.bf16.msra.mxu0 0
      %399 = vmatprep.subr.bf16.mxu0 0
      %400 = vmatpush2.bf16.msra.mxu0 0
      %401 = vmatprep.subr.bf16.mxu0 0
      %402 = vmatpush2.bf16.msra.mxu0 0
      %403 = vmatprep.subr.bf16.mxu0 0
      %404 = vmatpush2.bf16.msra.mxu0 0
      %405 = vmatprep.mubr.bf16.mxu0 0
      %406 = vmatmul.mubr.bf16.gmra.mxu0 %v372
      %v407 = vpop.f32.mrf.mxu0
      %v408 = vadd.f32 0.0, %v407
      %v409 = vpop.f32.mrf.mxu0
      %v410 = vpop.f32.mrf.mxu0
      %v411 = vadd.f32 0.0, %v410
      %v412 = vpop.f32.mrf.mxu0
      %413 = vdwg.mxu0
      %v414 = vmul.f32 %v302, %v408
      %v415 = vmul.f32 %v302, %v411
      %v416 = vadd.f32 %v318, %v414
      %v417 = vadd.f32 %v319, %v415
      %v418 = vadd.f32 %v416, %v311
      %v419 = vadd.f32 %v417, %v311
      %v420 = vmul.f32 %v315, %v323
      %v421 = vmul.f32 %v315, %v324
      %v422 = vadd.f32 %v418, %v420
      %v423 = vadd.f32 %v419, %v421
      %v424 = vpack.c.bf16 %v423, %v422
      %v426 = vsel %vm165, %v424, 0
      %428 = vmatprep.subr.bf16.mxu0 0
      %429 = vmatpush1.bf16.msra.mxu0 0
      %430 = vmatprep.subr.bf16.mxu0 0
      %431 = vmatpush1.bf16.msra.mxu0 0
      %432 = vmatprep.subr.bf16.mxu0 0
      %433 = vmatpush1.bf16.msra.mxu0 0
      %434 = vmatprep.subr.bf16.mxu0 0
      %435 = vmatpush1.bf16.msra.mxu0 0
      %436 = vmatprep.subr.bf16.mxu0 0
      %437 = vmatpush1.bf16.msra.mxu0 0
      %438 = vmatprep.subr.bf16.mxu0 0
      %439 = vmatpush1.bf16.msra.mxu0 0
      %440 = vmatprep.subr.bf16.mxu0 0
      %441 = vmatpush1.bf16.msra.mxu0 %v162
      %442 = vmatprep.subr.bf16.mxu0 0
      %443 = vmatpush1.bf16.msra.mxu0 %v161
      %444 = vmatprep.subr.bf16.mxu0 0
      %445 = vmatpush2.bf16.msra.mxu0 0
      %446 = vmatprep.subr.bf16.mxu0 0
      %447 = vmatpush2.bf16.msra.mxu0 0
      %448 = vmatprep.subr.bf16.mxu0 0
      %449 = vmatpush2.bf16.msra.mxu0 0
      %450 = vmatprep.subr.bf16.mxu0 0
      %451 = vmatpush2.bf16.msra.mxu0 0
      %452 = vmatprep.subr.bf16.mxu0 0
      %453 = vmatpush2.bf16.msra.mxu0 0
      %454 = vmatprep.subr.bf16.mxu0 0
      %455 = vmatpush2.bf16.msra.mxu0 0
      %456 = vmatprep.subr.bf16.mxu0 0
      %457 = vmatpush2.bf16.msra.mxu0 0
      %458 = vmatprep.subr.bf16.mxu0 0
      %459 = vmatpush2.bf16.msra.mxu0 0
      %460 = vmatprep.mubr.bf16.mxu0 0
      %461 = vmatmul.mubr.bf16.gmra.mxu0 %v426
      %v462 = vpop.f32.mrf.mxu0
      %v463 = vadd.f32 %v145, %v462
      %v464 = vpop.f32.mrf.mxu0
      %v465 = vpop.f32.mrf.mxu0
      %v466 = vadd.f32 %v146, %v465
      %v467 = vpop.f32.mrf.mxu0
      %468 = vdwg.mxu0
      %v469 = vtanh.pop %v463
      %v470 = vtanh.pop %v466
      %v471 = vpack.c.bf16 %v470, %v469
      %472 = vmatprep.subr.bf16.mxu0 0
      %473 = vmatpush1.bf16.msra.mxu0 %v252
      %474 = vmatprep.subr.bf16.mxu0 0
      %475 = vmatpush1.bf16.msra.mxu0 %v251
      %476 = vmatprep.subr.bf16.mxu0 0
      %477 = vmatpush1.bf16.msra.mxu0 %v250
      %478 = vmatprep.subr.bf16.mxu0 0
      %479 = vmatpush1.bf16.msra.mxu0 %v249
      %480 = vmatprep.subr.bf16.mxu0 0
      %481 = vmatpush1.bf16.msra.mxu0 %v248
      %482 = vmatprep.subr.bf16.mxu0 0
      %483 = vmatpush1.bf16.msra.mxu0 %v247
      %484 = vmatprep.subr.bf16.mxu0 0
      %485 = vmatpush1.bf16.msra.mxu0 %v246
      %486 = vmatprep.subr.bf16.mxu0 0
      %487 = vmatpush1.bf16.msra.mxu0 %v245
      %488 = vmatprep.subr.bf16.mxu0 0
      %489 = vmatpush2.bf16.msra.mxu0 0
      %490 = vmatprep.subr.bf16.mxu0 0
      %491 = vmatpush2.bf16.msra.mxu0 0
      %492 = vmatprep.subr.bf16.mxu0 0
      %493 = vmatpush2.bf16.msra.mxu0 0
      %494 = vmatprep.subr.bf16.mxu0 0
      %495 = vmatpush2.bf16.msra.mxu0 0
      %496 = vmatprep.subr.bf16.mxu0 0
      %497 = vmatpush2.bf16.msra.mxu0 0
      %498 = vmatprep.subr.bf16.mxu0 0
      %499 = vmatpush2.bf16.msra.mxu0 0
      %500 = vmatprep.subr.bf16.mxu0 0
      %501 = vmatpush2.bf16.msra.mxu0 0
      %502 = vmatprep.subr.bf16.mxu0 0
      %503 = vmatpush2.bf16.msra.mxu0 0
      %504 = vmatprep.mubr.bf16.mxu0 0
      %505 = vmatmul.mubr.bf16.gmra.mxu0 %v471
      %v506 = vpop.f32.mrf.mxu0
      %v507 = vadd.f32 0.0, %v506
      %v508 = vpop.f32.mrf.mxu0
      %v509 = vpop.f32.mrf.mxu0
      %v510 = vadd.f32 0.0, %v509
      %v511 = vpop.f32.mrf.mxu0
      %512 = vdwg.mxu0
      %v513 = vstv %s130
      %v514 = vmul.f32 %v513, %v507
      %v515 = vmul.f32 %v513, %v510
      %v516 = vadd.f32 %v422, %v514
      %v517 = vadd.f32 %v423, %v515
      %v519 = vlaneseq
      %v520 = vshrl.u32 %v519, 7
      %v521 = vsub.s32 0, %v520
      %v522 = vrot.slane %v136, %v521
      %v524 = vadd.f32 %v516, %v522
      %v525 = vadd.f32 %v517, %v522
      %s526 = sadd.s32 %s147, 2
      %s527 = smul.u32 %s526, 16
      %s528 = scalar_lea.vmem %s12, %s527
      %v529 = vld [vmem:[%s528] sm:$0xff]
      %v530 = vld [vmem:[%s528 + $0x8] sm:$0xff]
      %s531 = sld [smem:[#allocation7 + %s121]]
      %v532 = vstv %s531
      %v533 = vmul.f32 %v532, %v529
      %v534 = vmul.f32 %v532, %v530
      %v535 = vadd.f32 %v524, %v533
      %v536 = vadd.f32 %v525, %v534
    $region74: #{sampler.1} parent=1 // loop_footer
      %s125 = sadd.s32 1, %s121
    $region75: #{sampler.1} parent=1 // loop_footer_branch
      %120 = sbr.rel target = $region71
    $region76: #{sampler.1} parent=1 // loop_exit
      _
    %s537 = sld [smem:[#allocation2 + $0x3]]
    %s538 = sld [smem:[#allocation5 + $0x3]]
    %s539 = sld [smem:[#allocation8 + $0x3]]
    %s540 = scalar_lea.vmem %s4, 3
    %v541 = vld [vmem:[%s540] sm:$0x1]
    %s542 = scalar_lea.vmem %s5, 3
    %v543 = vld [vmem:[%s542] sm:$0x1]
    %s544 = scalar_lea.vmem %s6, 3
    %v545 = vld [vmem:[%s544] sm:$0x1]
    %v547 = vlaneseq
    %v548 = vshrl.u32 %v547, 7
    %v549 = vsub.s32 0, %v548
    %v550 = vrot.slane %v541, %v549
    %v552 = vadd.f32 %v96, %v550
    %v553 = vadd.f32 %v97, %v550
    %v554 = vadd.f32 %v94, %v550
    %v555 = vadd.f32 %v95, %v550
    %s556 = scalar_lea.vmem %s12, 144
    %v557 = vld [vmem:[%s556] sm:$0xff]
    %v558 = vld [vmem:[%s556 + $0x8] sm:$0xff]
    %v559 = vpack.c.bf16 %v127, %v126
    %v564 = vunpack.c.l.b16 %v98
    %v565 = vunpack.c.l.b16 %v99
    %v566 = vunpack.c.l.b16 %v100
    %v567 = vunpack.c.l.b16 %v101
    %v568 = vpack.c.b16 %v565, %v564
    %v569 = vpack.c.b16 %v567, %v566
    %vm572 = vcmask 261120
    %v574 = vsel %vm572, %v559, 0
    %576 = vmatprep.subr.bf16.mxu0 0
    %577 = vmatpush1.bf16.msra.mxu0 0
    %578 = vmatprep.subr.bf16.mxu0 0
    %579 = vmatpush1.bf16.msra.mxu0 0
    %580 = vmatprep.subr.bf16.mxu0 0
    %581 = vmatpush1.bf16.msra.mxu0 0
    %582 = vmatprep.subr.bf16.mxu0 0
    %583 = vmatpush1.bf16.msra.mxu0 0
    %584 = vmatprep.subr.bf16.mxu0 0
    %585 = vmatpush1.bf16.msra.mxu0 0
    %586 = vmatprep.subr.bf16.mxu0 0
    %587 = vmatpush1.bf16.msra.mxu0 0
    %588 = vmatprep.subr.bf16.mxu0 0
    %589 = vmatpush1.bf16.msra.mxu0 %v569
    %590 = vmatprep.subr.bf16.mxu0 0
    %591 = vmatpush1.bf16.msra.mxu0 %v568
    %592 = vmatprep.subr.bf16.mxu0 0
    %593 = vmatpush2.bf16.msra.mxu0 0
    %594 = vmatprep.subr.bf16.mxu0 0
    %595 = vmatpush2.bf16.msra.mxu0 0
    %596 = vmatprep.subr.bf16.mxu0 0
    %597 = vmatpush2.bf16.msra.mxu0 0
    %598 = vmatprep.subr.bf16.mxu0 0
    %599 = vmatpush2.bf16.msra.mxu0 0
    %600 = vmatprep.subr.bf16.mxu0 0
    %601 = vmatpush2.bf16.msra.mxu0 0
    %602 = vmatprep.subr.bf16.mxu0 0
    %603 = vmatpush2.bf16.msra.mxu0 0
    %604 = vmatprep.subr.bf16.mxu0 0
    %605 = vmatpush2.bf16.msra.mxu0 0
    %606 = vmatprep.subr.bf16.mxu0 0
    %607 = vmatpush2.bf16.msra.mxu0 0
    %608 = vmatprep.mubr.bf16.mxu0 0
    %609 = vmatmul.mubr.bf16.gmra.mxu0 %v574
    %v610 = vpop.f32.mrf.mxu0
    %v611 = vadd.f32 %v552, %v610
    %v612 = vpop.f32.mrf.mxu0
    %v613 = vpop.f32.mrf.mxu0
    %v614 = vadd.f32 %v553, %v613
    %v615 = vpop.f32.mrf.mxu0
    %616 = vdwg.mxu0
    %v617 = vtanh.pop %v611
    %v618 = vtanh.pop %v614
    %v619 = vpack.c.bf16 %v618, %v617
    %v636 = vunpack.c.l.b16 %v102
    %v637 = vunpack.c.l.b16 %v103
    %v638 = vunpack.c.l.b16 %v104
    %v639 = vunpack.c.l.b16 %v105
    %v640 = vunpack.c.l.b16 %v106
    %v641 = vunpack.c.l.b16 %v107
    %v642 = vunpack.c.l.b16 %v108
    %v643 = vunpack.c.l.b16 %v109
    %v644 = vunpack.c.l.b16 %v110
    %v645 = vunpack.c.l.b16 %v111
    %v646 = vunpack.c.l.b16 %v112
    %v647 = vunpack.c.l.b16 %v113
    %v648 = vunpack.c.l.b16 %v114
    %v649 = vunpack.c.l.b16 %v115
    %v650 = vunpack.c.l.b16 %v116
    %v651 = vunpack.c.l.b16 %v117
    %v652 = vpack.c.b16 %v637, %v636
    %v653 = vpack.c.b16 %v639, %v638
    %v654 = vpack.c.b16 %v641, %v640
    %v655 = vpack.c.b16 %v643, %v642
    %v656 = vpack.c.b16 %v645, %v644
    %v657 = vpack.c.b16 %v647, %v646
    %v658 = vpack.c.b16 %v649, %v648
    %v659 = vpack.c.b16 %v651, %v650
    %668 = vmatprep.subr.bf16.mxu0 0
    %669 = vmatpush1.bf16.msra.mxu0 %v659
    %670 = vmatprep.subr.bf16.mxu0 0
    %671 = vmatpush1.bf16.msra.mxu0 %v658
    %672 = vmatprep.subr.bf16.mxu0 0
    %673 = vmatpush1.bf16.msra.mxu0 %v657
    %674 = vmatprep.subr.bf16.mxu0 0
    %675 = vmatpush1.bf16.msra.mxu0 %v656
    %676 = vmatprep.subr.bf16.mxu0 0
    %677 = vmatpush1.bf16.msra.mxu0 %v655
    %678 = vmatprep.subr.bf16.mxu0 0
    %679 = vmatpush1.bf16.msra.mxu0 %v654
    %680 = vmatprep.subr.bf16.mxu0 0
    %681 = vmatpush1.bf16.msra.mxu0 %v653
    %682 = vmatprep.subr.bf16.mxu0 0
    %683 = vmatpush1.bf16.msra.mxu0 %v652
    %684 = vmatprep.subr.bf16.mxu0 0
    %685 = vmatpush2.bf16.msra.mxu0 0
    %686 = vmatprep.subr.bf16.mxu0 0
    %687 = vmatpush2.bf16.msra.mxu0 0
    %688 = vmatprep.subr.bf16.mxu0 0
    %689 = vmatpush2.bf16.msra.mxu0 0
    %690 = vmatprep.subr.bf16.mxu0 0
    %691 = vmatpush2.bf16.msra.mxu0 0
    %692 = vmatprep.subr.bf16.mxu0 0
    %693 = vmatpush2.bf16.msra.mxu0 0
    %694 = vmatprep.subr.bf16.mxu0 0
    %695 = vmatpush2.bf16.msra.mxu0 0
    %696 = vmatprep.subr.bf16.mxu0 0
    %697 = vmatpush2.bf16.msra.mxu0 0
    %698 = vmatprep.subr.bf16.mxu0 0
    %699 = vmatpush2.bf16.msra.mxu0 0
    %700 = vmatprep.mubr.bf16.mxu0 0
    %701 = vmatmul.mubr.bf16.gmra.mxu0 %v619
    %v702 = vpop.f32.mrf.mxu0
    %v703 = vadd.f32 0.0, %v702
    %v704 = vpop.f32.mrf.mxu0
    %v705 = vpop.f32.mrf.mxu0
    %v706 = vadd.f32 0.0, %v705
    %v707 = vpop.f32.mrf.mxu0
    %708 = vdwg.mxu0
    %v709 = vstv %s537
    %v710 = vmul.f32 %v709, %v703
    %v711 = vmul.f32 %v709, %v706
    %v712 = vadd.f32 %v126, %v710
    %v713 = vadd.f32 %v127, %v711
    %v715 = vlaneseq
    %v716 = vshrl.u32 %v715, 7
    %v717 = vsub.s32 0, %v716
    %v718 = vrot.slane %v543, %v717
    %v720 = vadd.f32 %v712, %v718
    %v721 = vadd.f32 %v713, %v718
    %v722 = vstv %s538
    %v723 = vmul.f32 %v722, %v557
    %v724 = vmul.f32 %v722, %v558
    %v725 = vadd.f32 %v720, %v723
    %v726 = vadd.f32 %v721, %v724
    %s727 = scalar_lea.vmem %s12, 160
    %v728 = vld [vmem:[%s727] sm:$0xff]
    %v729 = vld [vmem:[%s727 + $0x8] sm:$0xff]
    %v730 = vpack.c.bf16 %v726, %v725
    %v732 = vsel %vm572, %v730, 0
    %734 = vmatprep.subr.bf16.mxu0 0
    %735 = vmatpush1.bf16.msra.mxu0 0
    %736 = vmatprep.subr.bf16.mxu0 0
    %737 = vmatpush1.bf16.msra.mxu0 0
    %738 = vmatprep.subr.bf16.mxu0 0
    %739 = vmatpush1.bf16.msra.mxu0 0
    %740 = vmatprep.subr.bf16.mxu0 0
    %741 = vmatpush1.bf16.msra.mxu0 0
    %742 = vmatprep.subr.bf16.mxu0 0
    %743 = vmatpush1.bf16.msra.mxu0 0
    %744 = vmatprep.subr.bf16.mxu0 0
    %745 = vmatpush1.bf16.msra.mxu0 0
    %746 = vmatprep.subr.bf16.mxu0 0
    %747 = vmatpush1.bf16.msra.mxu0 %v569
    %748 = vmatprep.subr.bf16.mxu0 0
    %749 = vmatpush1.bf16.msra.mxu0 %v568
    %750 = vmatprep.subr.bf16.mxu0 0
    %751 = vmatpush2.bf16.msra.mxu0 0
    %752 = vmatprep.subr.bf16.mxu0 0
    %753 = vmatpush2.bf16.msra.mxu0 0
    %754 = vmatprep.subr.bf16.mxu0 0
    %755 = vmatpush2.bf16.msra.mxu0 0
    %756 = vmatprep.subr.bf16.mxu0 0
    %757 = vmatpush2.bf16.msra.mxu0 0
    %758 = vmatprep.subr.bf16.mxu0 0
    %759 = vmatpush2.bf16.msra.mxu0 0
    %760 = vmatprep.subr.bf16.mxu0 0
    %761 = vmatpush2.bf16.msra.mxu0 0
    %762 = vmatprep.subr.bf16.mxu0 0
    %763 = vmatpush2.bf16.msra.mxu0 0
    %764 = vmatprep.subr.bf16.mxu0 0
    %765 = vmatpush2.bf16.msra.mxu0 0
    %766 = vmatprep.mubr.bf16.mxu0 0
    %767 = vmatmul.mubr.bf16.gmra.mxu0 %v732
    %v768 = vpop.f32.mrf.mxu0
    %v769 = vadd.f32 %v552, %v768
    %v770 = vpop.f32.mrf.mxu0
    %v771 = vpop.f32.mrf.mxu0
    %v772 = vadd.f32 %v553, %v771
    %v773 = vpop.f32.mrf.mxu0
    %774 = vdwg.mxu0
    %v775 = vtanh.pop %v769
    %v776 = vtanh.pop %v772
    %v777 = vpack.c.bf16 %v776, %v775
    %778 = vmatprep.subr.bf16.mxu0 0
    %779 = vmatpush1.bf16.msra.mxu0 %v659
    %780 = vmatprep.subr.bf16.mxu0 0
    %781 = vmatpush1.bf16.msra.mxu0 %v658
    %782 = vmatprep.subr.bf16.mxu0 0
    %783 = vmatpush1.bf16.msra.mxu0 %v657
    %784 = vmatprep.subr.bf16.mxu0 0
    %785 = vmatpush1.bf16.msra.mxu0 %v656
    %786 = vmatprep.subr.bf16.mxu0 0
    %787 = vmatpush1.bf16.msra.mxu0 %v655
    %788 = vmatprep.subr.bf16.mxu0 0
    %789 = vmatpush1.bf16.msra.mxu0 %v654
    %790 = vmatprep.subr.bf16.mxu0 0
    %791 = vmatpush1.bf16.msra.mxu0 %v653
    %792 = vmatprep.subr.bf16.mxu0 0
    %793 = vmatpush1.bf16.msra.mxu0 %v652
    %794 = vmatprep.subr.bf16.mxu0 0
    %795 = vmatpush2.bf16.msra.mxu0 0
    %796 = vmatprep.subr.bf16.mxu0 0
    %797 = vmatpush2.bf16.msra.mxu0 0
    %798 = vmatprep.subr.bf16.mxu0 0
    %799 = vmatpush2.bf16.msra.mxu0 0
    %800 = vmatprep.subr.bf16.mxu0 0
    %801 = vmatpush2.bf16.msra.mxu0 0
    %802 = vmatprep.subr.bf16.mxu0 0
    %803 = vmatpush2.bf16.msra.mxu0 0
    %804 = vmatprep.subr.bf16.mxu0 0
    %805 = vmatpush2.bf16.msra.mxu0 0
    %806 = vmatprep.subr.bf16.mxu0 0
    %807 = vmatpush2.bf16.msra.mxu0 0
    %808 = vmatprep.subr.bf16.mxu0 0
    %809 = vmatpush2.bf16.msra.mxu0 0
    %810 = vmatprep.mubr.bf16.mxu0 0
    %811 = vmatmul.mubr.bf16.gmra.mxu0 %v777
    %v812 = vpop.f32.mrf.mxu0
    %v813 = vadd.f32 0.0, %v812
    %v814 = vpop.f32.mrf.mxu0
    %v815 = vpop.f32.mrf.mxu0
    %v816 = vadd.f32 0.0, %v815
    %v817 = vpop.f32.mrf.mxu0
    %818 = vdwg.mxu0
    %v819 = vmul.f32 %v709, %v813
    %v820 = vmul.f32 %v709, %v816
    %v821 = vadd.f32 %v725, %v819
    %v822 = vadd.f32 %v726, %v820
    %v823 = vadd.f32 %v821, %v718
    %v824 = vadd.f32 %v822, %v718
    %v825 = vmul.f32 %v722, %v728
    %v826 = vmul.f32 %v722, %v729
    %v827 = vadd.f32 %v823, %v825
    %v828 = vadd.f32 %v824, %v826
    %v829 = vpack.c.bf16 %v828, %v827
    %v831 = vsel %vm572, %v829, 0
    %833 = vmatprep.subr.bf16.mxu0 0
    %834 = vmatpush1.bf16.msra.mxu0 0
    %835 = vmatprep.subr.bf16.mxu0 0
    %836 = vmatpush1.bf16.msra.mxu0 0
    %837 = vmatprep.subr.bf16.mxu0 0
    %838 = vmatpush1.bf16.msra.mxu0 0
    %839 = vmatprep.subr.bf16.mxu0 0
    %840 = vmatpush1.bf16.msra.mxu0 0
    %841 = vmatprep.subr.bf16.mxu0 0
    %842 = vmatpush1.bf16.msra.mxu0 0
    %843 = vmatprep.subr.bf16.mxu0 0
    %844 = vmatpush1.bf16.msra.mxu0 0
    %845 = vmatprep.subr.bf16.mxu0 0
    %846 = vmatpush1.bf16.msra.mxu0 %v569
    %847 = vmatprep.subr.bf16.mxu0 0
    %848 = vmatpush1.bf16.msra.mxu0 %v568
    %849 = vmatprep.subr.bf16.mxu0 0
    %850 = vmatpush2.bf16.msra.mxu0 0
    %851 = vmatprep.subr.bf16.mxu0 0
    %852 = vmatpush2.bf16.msra.mxu0 0
    %853 = vmatprep.subr.bf16.mxu0 0
    %854 = vmatpush2.bf16.msra.mxu0 0
    %855 = vmatprep.subr.bf16.mxu0 0
    %856 = vmatpush2.bf16.msra.mxu0 0
    %857 = vmatprep.subr.bf16.mxu0 0
    %858 = vmatpush2.bf16.msra.mxu0 0
    %859 = vmatprep.subr.bf16.mxu0 0
    %860 = vmatpush2.bf16.msra.mxu0 0
    %861 = vmatprep.subr.bf16.mxu0 0
    %862 = vmatpush2.bf16.msra.mxu0 0
    %863 = vmatprep.subr.bf16.mxu0 0
    %864 = vmatpush2.bf16.msra.mxu0 0
    %865 = vmatprep.mubr.bf16.mxu0 0
    %866 = vmatmul.mubr.bf16.gmra.mxu0 %v831
    %v867 = vpop.f32.mrf.mxu0
    %v868 = vadd.f32 %v554, %v867
    %v869 = vpop.f32.mrf.mxu0
    %v870 = vpop.f32.mrf.mxu0
    %v871 = vadd.f32 %v555, %v870
    %v872 = vpop.f32.mrf.mxu0
    %873 = vdwg.mxu0
    %v874 = vtanh.pop %v868
    %v875 = vtanh.pop %v871
    %v876 = vpack.c.bf16 %v875, %v874
    %877 = vmatprep.subr.bf16.mxu0 0
    %878 = vmatpush1.bf16.msra.mxu0 %v659
    %879 = vmatprep.subr.bf16.mxu0 0
    %880 = vmatpush1.bf16.msra.mxu0 %v658
    %881 = vmatprep.subr.bf16.mxu0 0
    %882 = vmatpush1.bf16.msra.mxu0 %v657
    %883 = vmatprep.subr.bf16.mxu0 0
    %884 = vmatpush1.bf16.msra.mxu0 %v656
    %885 = vmatprep.subr.bf16.mxu0 0
    %886 = vmatpush1.bf16.msra.mxu0 %v655
    %887 = vmatprep.subr.bf16.mxu0 0
    %888 = vmatpush1.bf16.msra.mxu0 %v654
    %889 = vmatprep.subr.bf16.mxu0 0
    %890 = vmatpush1.bf16.msra.mxu0 %v653
    %891 = vmatprep.subr.bf16.mxu0 0
    %892 = vmatpush1.bf16.msra.mxu0 %v652
    %893 = vmatprep.subr.bf16.mxu0 0
    %894 = vmatpush2.bf16.msra.mxu0 0
    %895 = vmatprep.subr.bf16.mxu0 0
    %896 = vmatpush2.bf16.msra.mxu0 0
    %897 = vmatprep.subr.bf16.mxu0 0
    %898 = vmatpush2.bf16.msra.mxu0 0
    %899 = vmatprep.subr.bf16.mxu0 0
    %900 = vmatpush2.bf16.msra.mxu0 0
    %901 = vmatprep.subr.bf16.mxu0 0
    %902 = vmatpush2.bf16.msra.mxu0 0
    %903 = vmatprep.subr.bf16.mxu0 0
    %904 = vmatpush2.bf16.msra.mxu0 0
    %905 = vmatprep.subr.bf16.mxu0 0
    %906 = vmatpush2.bf16.msra.mxu0 0
    %907 = vmatprep.subr.bf16.mxu0 0
    %908 = vmatpush2.bf16.msra.mxu0 0
    %909 = vmatprep.mubr.bf16.mxu0 0
    %910 = vmatmul.mubr.bf16.gmra.mxu0 %v876
    %v911 = vpop.f32.mrf.mxu0
    %v912 = vadd.f32 0.0, %v911
    %v913 = vpop.f32.mrf.mxu0
    %v914 = vpop.f32.mrf.mxu0
    %v915 = vadd.f32 0.0, %v914
    %v916 = vpop.f32.mrf.mxu0
    %917 = vdwg.mxu0
    %v918 = vstv %s539
    %v919 = vmul.f32 %v918, %v912
    %v920 = vmul.f32 %v918, %v915
    %v921 = vadd.f32 %v827, %v919
    %v922 = vadd.f32 %v828, %v920
    %v924 = vlaneseq
    %v925 = vshrl.u32 %v924, 7
    %v926 = vsub.s32 0, %v925
    %v927 = vrot.slane %v545, %v926
    %v929 = vadd.f32 %v921, %v927
    %v930 = vadd.f32 %v922, %v927
    %931 = vst.msk [vmem:[#allocation10] sm:$0xff] %vm572, %v929
    %932 = vst.msk [vmem:[#allocation10 + $0x8] sm:$0xff] %vm572, %v930
    // Predicated region
    $region77: #{sampler.1} parent=1 // pred_check
      _
    $region78: #{sampler.1} parent=1 // pred_check_branch
      %934 = sbr.rel (0) target = $region80
    $region79: #{sampler.1} parent=1 // pred_region
      %s936 = ssub.s32 256, 256
      %937 = vsyncadd [#allocation3], %s936
      %s938 = sshll.u32 [#allocation10], 4
      %s939 = int_to_ptr.vmem [resolvable:$true] %s938
      %944 = dma.vmem_to_hbm [thread:$0]  %s939, 256, %s13, [#allocation3], 128, 128, 8
    $region80: #{sampler.1} parent=1 // pred_fallthru
      _
    // Predicated region
    $region81: #{sampler.1} parent=1 // pred_check
      _
    $region82: #{sampler.1} parent=1 // pred_check_branch
      %946 = sbr.rel (0) target = $region84
    $region83: #{sampler.1} parent=1 // pred_region
      %947 = dma.done [#allocation3], 256
    $region84: #{sampler.1} parent=1 // pred_fallthru
      _
    %948 = vsyncpa [#allocation3], 1
    %949 = vsyncpa [#allocation4], 1
    %950 = vsyncpa [#allocation6], 1
    %951 = vsyncpa [#allocation9], 1

</llo_original>
